<compile_context>
chip_gen: v6e
topology: v6e:2x2x1
jax: 0.10.0
libtpu: 0.0.40
codegen_flags: <defaults>
</compile_context>

<pallas_src>
import functools
import math

import numpy as np
import jax
import jax.numpy as jnp
from jax.experimental import pallas as pl
from jax.experimental.pallas import tpu as pltpu

# Set to jnp.bfloat16 on v6e/v7x to halve DMA bytes and use the native bf16 MXU
# (accumulation stays f32). Default f32 keeps the numerical check tight.
COMPUTE_DTYPE = None


def _round_up(v, m):
    return (v + m - 1) // m * m


# ---------------------------------------------------------------------------
# Core Pallas kernel: out = (relu?)(X) @ W + b      (one fused MXU matmul)
# ---------------------------------------------------------------------------
def _matmul_bias_kernel(x_ref, w_ref, b_ref, o_ref, *, apply_relu):
    x = x_ref[...]
    if apply_relu:
        x = jnp.maximum(x, 0)                    # fused ReLU (VPU); relu(0-pad)==0
    y = jnp.dot(x, w_ref[...], preferred_element_type=jnp.float32)
    y = y + b_ref[...].astype(jnp.float32)       # bias row broadcast
    o_ref[...] = y.astype(o_ref.dtype)


def _row_block(m, max_rows=512):
    """Rows per grid step: prefer >=2 grid steps (dual-TensorCore chips) with
    8-row-aligned blocks; cap rows so double-buffered blocks stay well inside
    VMEM (sized for v7x's 64 MiB / 32 MiB scoped default)."""
    if m % 16 == 0 and m // 2 <= max_rows:
        return m // 2
    for bm in range(min(max_rows, m), 7, -8):
        if m % bm == 0:
            return bm
    return m


def matmul_bias(x, w, b, *, apply_relu=False, compute_dtype=None, out_dtype=None):
    """x: [M, K], w: [K, F], b: [F] -> [M, F] via a single pallas_call."""
    m, k = x.shape
    k2, f = w.shape
    assert k2 == k
    out_dtype = out_dtype if out_dtype is not None else x.dtype

    if compute_dtype is not None:
        x = x.astype(compute_dtype)
        w = w.astype(compute_dtype)

    # Sublane-pad M and lane-pad F so every block is (8,128)-aligned; the pad is
    # zeros (bias columns too), so the valid region is untouched and sliced back.
    mp = _round_up(m, 8)
    fp = _round_up(f, 128)
    if mp != m:
        x = jnp.pad(x, ((0, mp - m), (0, 0)))
    if fp != f:
        w = jnp.pad(w, ((0, 0), (0, fp - f)))
        b = jnp.pad(b, ((0, fp - f),))
    b2 = b.reshape(1, fp).astype(jnp.float32)

    bm = _row_block(mp)
    grid = (mp // bm,)

    flops = 2 * mp * k * fp
    bytes_accessed = (mp * k * x.dtype.itemsize + k * fp * w.dtype.itemsize
                      + fp * 4 + mp * fp * np.dtype(out_dtype).itemsize)

    out = pl.pallas_call(
        functools.partial(_matmul_bias_kernel, apply_relu=apply_relu),
        out_shape=jax.ShapeDtypeStruct((mp, fp), out_dtype),
        grid_spec=pltpu.PrefetchScalarGridSpec(
            num_scalar_prefetch=0,
            grid=grid,
            in_specs=[
                pl.BlockSpec((bm, k), lambda i: (i, 0)),   # row block of X
                pl.BlockSpec((k, fp), lambda i: (0, 0)),   # whole weight, resident
                pl.BlockSpec((1, fp), lambda i: (0, 0)),   # bias row, resident
            ],
            out_specs=pl.BlockSpec((bm, fp), lambda i: (i, 0)),
        ),
        compiler_params=pltpu.CompilerParams(dimension_semantics=("parallel",)),
        cost_estimate=pl.CostEstimate(flops=int(flops), transcendentals=0,
                                      bytes_accessed=int(bytes_accessed)),
    )(x, w, b2)

    if mp != m or fp != f:
        out = out[:m, :f]
    return out


# ---------------------------------------------------------------------------
# ConvTranspose2d(k=4, s=2, p=1) with fused ReLU, via one packed matmul
# ---------------------------------------------------------------------------
def _pack_convT_weight(w):
    """Pack ConvTranspose2d weight [Cin, Cout, 4, 4] (PyTorch layout) into the
    single matmul operand [9*Cin, 4*Cout]:
        Wpk[(e*3+f)*Cin + ci, (a*2+b)*Cout + co] = w[ci, co, 3+a-2e, 3+b-2f]
    (zero where a kernel tap does not contribute to that output parity)."""
    cin, cout = w.shape[0], w.shape[1]
    zeros = jnp.zeros((cin, cout), w.dtype)
    row_blocks = []
    for e in range(3):
        for f in range(3):
            cols = []
            for pa in range(2):
                for pb in range(2):
                    if pa <= e <= pa + 1 and pb <= f <= pb + 1:
                        cols.append(w[:, :, 3 + pa - 2 * e, 3 + pb - 2 * f])
                    else:
                        cols.append(zeros)
            row_blocks.append(jnp.concatenate(cols, axis=1))
    return jnp.concatenate(row_blocks, axis=0)


def conv_transpose_4x2x1(x_nhwc, w, b, *, compute_dtype=None):
    """ReLU + ConvTranspose2d(kernel=4, stride=2, padding=1) + bias.
    x_nhwc: [N, H, W, Cin] (pre-ReLU), w: [Cin, Cout, 4, 4], b: [Cout]
    -> [N, 2H, 2W, Cout]."""
    n, h, wd, cin = x_nhwc.shape
    assert w.shape[0] == cin and w.shape[2] == 4 and w.shape[3] == 4
    cout = w.shape[1]

    # Layout plumbing (XLA glue): zero-pad by 1 and gather the 3x3 neighbourhoods.
    # ReLU commutes with this (relu(0)==0), so it is fused inside the kernel.
    xp = jnp.pad(x_nhwc, ((0, 0), (1, 1), (1, 1), (0, 0)))
    pieces = [xp[:, e:e + h, f:f + wd, :] for e in range(3) for f in range(3)]
    patches = jnp.concatenate(pieces, axis=-1).reshape(n * h * wd, 9 * cin)

    wpk = _pack_convT_weight(w)          # [9*Cin, 4*Cout] -> one fused MXU call
    bpk = jnp.tile(b, 4)                 # bias per (parity, channel) column

    y = matmul_bias(patches, wpk, bpk, apply_relu=True,
                    compute_dtype=compute_dtype, out_dtype=x_nhwc.dtype)

    # Pixel-shuffle the 4 output parities back onto the spatial grid (XLA glue).
    y = y.reshape(n, h, wd, 2, 2, cout)
    y = y.transpose(0, 1, 3, 2, 4, 5).reshape(n, 2 * h, 2 * wd, cout)
    return y


# ---------------------------------------------------------------------------
# CNN_Decoder: config, params, forward
# ---------------------------------------------------------------------------
def build_decoder_config(layer_sizes, input_size, output_size):
    """Mirror CNN_Decoder.__init__ (defaults kernel=4, stride=2, padding=1)."""
    sizes = [input_size] + list(layer_sizes) + [output_size]
    n_layers = len(sizes) - 1
    current_size = output_size
    current_channels = 1
    convs = []                                           # construction order
    for l_id in range(n_layers - 1):
        convs.append((sizes[l_id], current_channels))    # (in_ch, out_ch)
        current_size = current_size / 2
        current_channels = sizes[l_id]
    linear = (input_size, int(current_size * current_size * current_channels))
    return {"linear": linear, "convs": convs[::-1]}      # execution order


def init_params(key, cfg, dtype=jnp.float32):
    lin_in, lin_out = cfg["linear"]
    k1, k2, key = jax.random.split(key, 3)
    bound = 1.0 / math.sqrt(lin_in)
    params = {
        "lin_w": jax.random.uniform(k1, (lin_out, lin_in), dtype, -bound, bound),
        "lin_b": jax.random.uniform(k2, (lin_out,), dtype, -bound, bound),
        "convs": [],
    }
    for cin, cout in cfg["convs"]:
        k1, k2, key = jax.random.split(key, 3)
        bound = 1.0 / math.sqrt(cout * 4 * 4)            # torch ConvT fan_in
        w = jax.random.uniform(k1, (cin, cout, 4, 4), dtype, -bound, bound)
        b = jax.random.uniform(k2, (cout,), dtype, -bound, bound)
        params["convs"].append((w, b))
    return params


def decoder_forward_pallas(params, x, *, cfg, compute_dtype=None):
    n = x.shape[0]
    _, lin_out = cfg["linear"]
    # The (reversed) ModuleList executes the Linear first.
    h = matmul_bias(x, params["lin_w"].T, params["lin_b"],
                    apply_relu=False, compute_dtype=compute_dtype,
                    out_dtype=x.dtype)                             # [N, lin_out]
    c0 = cfg["convs"][0][0]                                        # layers[1][1].in_channels
    s = math.isqrt(lin_out // c0)
    h = h.reshape(n, c0, s, s)                                     # torch NCHW reshape
    h = jnp.transpose(h, (0, 2, 3, 1))                             # NHWC for conv kernels
    for (w, b) in params["convs"]:
        h = conv_transpose_4x2x1(h, w, b, compute_dtype=compute_dtype)
    return jnp.transpose(h, (0, 3, 1, 2))                          # back to NCHW


# ---------------------------------------------------------------------------
# Pure-JAX reference (exact PyTorch semantics)
# ---------------------------------------------------------------------------
def _conv_transpose2d_ref(x, w, b, stride=2, padding=1):
    k = w.shape[2]
    wf = jnp.flip(w, (2, 3)).transpose(1, 0, 2, 3)     # [Cout, Cin, k, k]
    y = jax.lax.conv_general_dilated(
        x, wf, window_strides=(1, 1),
        padding=[(k - 1 - padding, k - 1 - padding)] * 2,
        lhs_dilation=(stride, stride),
        dimension_numbers=("NCHW", "OIHW", "NCHW"),
        precision=jax.lax.Precision.HIGHEST)
    return y + b[None, :, None, None]


def decoder_forward_reference(params, x, cfg):
    n = x.shape[0]
    h = jnp.dot(x, params["lin_w"].T,
                precision=jax.lax.Precision.HIGHEST) + params["lin_b"]
    c0 = cfg["convs"][0][0]
    h = h.reshape(n, c0, -1)
    s = int(math.isqrt(h.shape[-1]))
    h = h.reshape(n, c0, s, s)
    for (w, b) in params["convs"]:
        h = _conv_transpose2d_ref(jax.nn.relu(h), w, b)
    return h


if __name__ == "__main__":
    # Small CNN_Decoder instance:
    #   latent 32 -> Linear(32, 128) -> [2, 8, 4, 4]
    #   -> ReLU + ConvT(8->32, 4, 2, 1)  -> [2, 32, 8, 8]
    #   -> ReLU + ConvT(32->1, 4, 2, 1)  -> [2, 1, 16, 16]
    layer_sizes = [8, 16]
    input_size = 32           # latent dim
    output_size = 16          # final spatial size
    batch = 2

    cfg = build_decoder_config(layer_sizes, input_size, output_size)

    key = jax.random.PRNGKey(0)
    kp, kx = jax.random.split(key)
    params = init_params(kp, cfg)
    x = jax.random.normal(kx, (batch, input_size), dtype=jnp.float32)

    fwd = jax.jit(functools.partial(decoder_forward_pallas, cfg=cfg,
                                    compute_dtype=COMPUTE_DTYPE))
    out = jax.block_until_ready(fwd(params, x))
    ref = jax.block_until_ready(decoder_forward_reference(params, x, cfg))

    assert out.shape == (batch, 1, output_size, output_size), out.shape
    max_err = float(jnp.max(jnp.abs(out - ref)))
    assert jnp.allclose(out, ref, atol=1e-3, rtol=1e-3), max_err
    print("KERNEL_OK")
</pallas_src>

<mosaic_0001>
module attributes {stable_mosaic.version = 11 : i64} {
  func.func @_matmul_bias_kernel(%arg0: i32, %arg1: memref<8x32xf32, #tpu.memory_space<vmem>>, %arg2: memref<32x128xf32, #tpu.memory_space<vmem>>, %arg3: memref<1x128xf32, #tpu.memory_space<vmem>>, %arg4: memref<8x128xf32, #tpu.memory_space<vmem>>) attributes {dimension_semantics = [#tpu.dimension_semantics<parallel>], iteration_bounds = array<i64: 1>, scalar_prefetch = 0 : i64, scratch_operands = 0 : i64, tpu.core_type = #tpu.core_type<tc>, window_params = [{transform_indices = @transform_0, window_bounds = array<i64: 8, 32>}, {pipeline_mode = #tpu.pipeline_mode<synchronous>, transform_indices = @transform_1, window_bounds = array<i64: 32, 128>}, {pipeline_mode = #tpu.pipeline_mode<synchronous>, transform_indices = @transform_2, window_bounds = array<i64: 1, 128>}, {transform_indices = @transform_3, window_bounds = array<i64: 8, 128>}]} {
    %c0 = arith.constant 0 : index
    %c0_0 = arith.constant 0 : index
    %0 = vector.load %arg1[%c0, %c0_0] : memref<8x32xf32, #tpu.memory_space<vmem>>, vector<8x32xf32>
    %c0_1 = arith.constant 0 : index
    %c0_2 = arith.constant 0 : index
    %1 = vector.load %arg2[%c0_1, %c0_2] : memref<32x128xf32, #tpu.memory_space<vmem>>, vector<32x128xf32>
    %cst = arith.constant dense<0.000000e+00> : vector<8x128xf32>
    %2 = tpu.matmul %0, %1, %cst {dimension_numbers = #tpu.dot_dimension_numbers<[1], [0], [0], [1], [0, 0, 1, 1], [], []>} : vector<8x32xf32>, vector<32x128xf32>, vector<8x128xf32> -> vector<8x128xf32>
    %c0_3 = arith.constant 0 : index
    %c0_4 = arith.constant 0 : index
    %3 = vector.load %arg3[%c0_3, %c0_4] : memref<1x128xf32, #tpu.memory_space<vmem>>, vector<1x128xf32>
    %4 = vector.broadcast %3 : vector<1x128xf32> to vector<8x128xf32>
    %5 = arith.addf %2, %4 : vector<8x128xf32>
    %c0_5 = arith.constant 0 : index
    %c0_6 = arith.constant 0 : index
    %6 = vector.load %arg4[%c0_5, %c0_6] : memref<8x128xf32, #tpu.memory_space<vmem>>, vector<8x128xf32>
    tpu.vector_store %arg4[%c0_5, %c0_6], %5 {strides = array<i32>} : memref<8x128xf32, #tpu.memory_space<vmem>>, vector<8x128xf32>,
    return
  }
  func.func @transform_0(%arg0: i32) -> (i32, i32) {
    %c0_i32 = arith.constant 0 : i32
    %c0_i32_0 = arith.constant 0 : i32
    return %arg0, %c0_i32 : i32, i32
  }
  func.func @transform_1(%arg0: i32) -> (i32, i32) {
    %c0_i32 = arith.constant 0 : i32
    %c0_i32_0 = arith.constant 0 : i32
    %c0_i32_1 = arith.constant 0 : i32
    return %c0_i32, %c0_i32_0 : i32, i32
  }
  func.func @transform_2(%arg0: i32) -> (i32, i32) {
    %c0_i32 = arith.constant 0 : i32
    %c0_i32_0 = arith.constant 0 : i32
    %c0_i32_1 = arith.constant 0 : i32
    return %c0_i32, %c0_i32_0 : i32, i32
  }
  func.func @transform_3(%arg0: i32) -> (i32, i32) {
    %c0_i32 = arith.constant 0 : i32
    %c0_i32_0 = arith.constant 0 : i32
    return %arg0, %c0_i32 : i32, i32
  }
}

module attributes {stable_mosaic.version = 11 : i64} {
  func.func @_matmul_bias_kernel(%arg0: i32, %arg1: memref<16x72xf32, #tpu.memory_space<vmem>>, %arg2: memref<72x128xf32, #tpu.memory_space<vmem>>, %arg3: memref<1x128xf32, #tpu.memory_space<vmem>>, %arg4: memref<16x128xf32, #tpu.memory_space<vmem>>) attributes {dimension_semantics = [#tpu.dimension_semantics<parallel>], iteration_bounds = array<i64: 2>, scalar_prefetch = 0 : i64, scratch_operands = 0 : i64, tpu.core_type = #tpu.core_type<tc>, window_params = [{transform_indices = @transform_0, window_bounds = array<i64: 16, 72>}, {pipeline_mode = #tpu.pipeline_mode<synchronous>, transform_indices = @transform_1, window_bounds = array<i64: 72, 128>}, {pipeline_mode = #tpu.pipeline_mode<synchronous>, transform_indices = @transform_2, window_bounds = array<i64: 1, 128>}, {transform_indices = @transform_3, window_bounds = array<i64: 16, 128>}]} {
    %c0 = arith.constant 0 : index
    %c0_0 = arith.constant 0 : index
    %0 = vector.load %arg1[%c0, %c0_0] : memref<16x72xf32, #tpu.memory_space<vmem>>, vector<16x72xf32>
    %cst = arith.constant 0.000000e+00 : f32
    %1 = vector.broadcast %cst : f32 to vector<16x72xf32>
    %2 = arith.maximumf %0, %1 : vector<16x72xf32>
    %c0_1 = arith.constant 0 : index
    %c0_2 = arith.constant 0 : index
    %3 = vector.load %arg2[%c0_1, %c0_2] : memref<72x128xf32, #tpu.memory_space<vmem>>, vector<72x128xf32>
    %cst_3 = arith.constant dense<0.000000e+00> : vector<16x128xf32>
    %4 = tpu.matmul %2, %3, %cst_3 {dimension_numbers = #tpu.dot_dimension_numbers<[1], [0], [0], [1], [0, 0, 1, 1], [], []>} : vector<16x72xf32>, vector<72x128xf32>, vector<16x128xf32> -> vector<16x128xf32>
    %c0_4 = arith.constant 0 : index
    %c0_5 = arith.constant 0 : index
    %5 = vector.load %arg3[%c0_4, %c0_5] : memref<1x128xf32, #tpu.memory_space<vmem>>, vector<1x128xf32>
    %6 = vector.broadcast %5 : vector<1x128xf32> to vector<16x128xf32>
    %7 = arith.addf %4, %6 : vector<16x128xf32>
    %c0_6 = arith.constant 0 : index
    %c0_7 = arith.constant 0 : index
    %8 = vector.load %arg4[%c0_6, %c0_7] : memref<16x128xf32, #tpu.memory_space<vmem>>, vector<16x128xf32>
    tpu.vector_store %arg4[%c0_6, %c0_7], %7 {strides = array<i32>} : memref<16x128xf32, #tpu.memory_space<vmem>>, vector<16x128xf32>,
    return
  }
  func.func @transform_0(%arg0: i32) -> (i32, i32) {
    %c0_i32 = arith.constant 0 : i32
    %c0_i32_0 = arith.constant 0 : i32
    return %arg0, %c0_i32 : i32, i32
  }
  func.func @transform_1(%arg0: i32) -> (i32, i32) {
    %c0_i32 = arith.constant 0 : i32
    %c0_i32_0 = arith.constant 0 : i32
    %c0_i32_1 = arith.constant 0 : i32
    return %c0_i32, %c0_i32_0 : i32, i32
  }
  func.func @transform_2(%arg0: i32) -> (i32, i32) {
    %c0_i32 = arith.constant 0 : i32
    %c0_i32_0 = arith.constant 0 : i32
    %c0_i32_1 = arith.constant 0 : i32
    return %c0_i32, %c0_i32_0 : i32, i32
  }
  func.func @transform_3(%arg0: i32) -> (i32, i32) {
    %c0_i32 = arith.constant 0 : i32
    %c0_i32_0 = arith.constant 0 : i32
    return %arg0, %c0_i32 : i32, i32
  }
}

module attributes {stable_mosaic.version = 11 : i64} {
  func.func @_matmul_bias_kernel(%arg0: i32, %arg1: memref<64x288xf32, #tpu.memory_space<vmem>>, %arg2: memref<288x128xf32, #tpu.memory_space<vmem>>, %arg3: memref<1x128xf32, #tpu.memory_space<vmem>>, %arg4: memref<64x128xf32, #tpu.memory_space<vmem>>) attributes {dimension_semantics = [#tpu.dimension_semantics<parallel>], iteration_bounds = array<i64: 2>, scalar_prefetch = 0 : i64, scratch_operands = 0 : i64, tpu.core_type = #tpu.core_type<tc>, window_params = [{transform_indices = @transform_0, window_bounds = array<i64: 64, 288>}, {pipeline_mode = #tpu.pipeline_mode<synchronous>, transform_indices = @transform_1, window_bounds = array<i64: 288, 128>}, {pipeline_mode = #tpu.pipeline_mode<synchronous>, transform_indices = @transform_2, window_bounds = array<i64: 1, 128>}, {transform_indices = @transform_3, window_bounds = array<i64: 64, 128>}]} {
    %c0 = arith.constant 0 : index
    %c0_0 = arith.constant 0 : index
    %0 = vector.load %arg1[%c0, %c0_0] : memref<64x288xf32, #tpu.memory_space<vmem>>, vector<64x288xf32>
    %cst = arith.constant 0.000000e+00 : f32
    %1 = vector.broadcast %cst : f32 to vector<64x288xf32>
    %2 = arith.maximumf %0, %1 : vector<64x288xf32>
    %c0_1 = arith.constant 0 : index
    %c0_2 = arith.constant 0 : index
    %3 = vector.load %arg2[%c0_1, %c0_2] : memref<288x128xf32, #tpu.memory_space<vmem>>, vector<288x128xf32>
    %cst_3 = arith.constant dense<0.000000e+00> : vector<64x128xf32>
    %4 = tpu.matmul %2, %3, %cst_3 {dimension_numbers = #tpu.dot_dimension_numbers<[1], [0], [0], [1], [0, 0, 1, 1], [], []>} : vector<64x288xf32>, vector<288x128xf32>, vector<64x128xf32> -> vector<64x128xf32>
    %c0_4 = arith.constant 0 : index
    %c0_5 = arith.constant 0 : index
    %5 = vector.load %arg3[%c0_4, %c0_5] : memref<1x128xf32, #tpu.memory_space<vmem>>, vector<1x128xf32>
    %6 = vector.broadcast %5 : vector<1x128xf32> to vector<64x128xf32>
    %7 = arith.addf %4, %6 : vector<64x128xf32>
    %c0_6 = arith.constant 0 : index
    %c0_7 = arith.constant 0 : index
    %8 = vector.load %arg4[%c0_6, %c0_7] : memref<64x128xf32, #tpu.memory_space<vmem>>, vector<64x128xf32>
    tpu.vector_store %arg4[%c0_6, %c0_7], %7 {strides = array<i32>} : memref<64x128xf32, #tpu.memory_space<vmem>>, vector<64x128xf32>,
    return
  }
  func.func @transform_0(%arg0: i32) -> (i32, i32) {
    %c0_i32 = arith.constant 0 : i32
    %c0_i32_0 = arith.constant 0 : i32
    return %arg0, %c0_i32 : i32, i32
  }
  func.func @transform_1(%arg0: i32) -> (i32, i32) {
    %c0_i32 = arith.constant 0 : i32
    %c0_i32_0 = arith.constant 0 : i32
    %c0_i32_1 = arith.constant 0 : i32
    return %c0_i32, %c0_i32_0 : i32, i32
  }
  func.func @transform_2(%arg0: i32) -> (i32, i32) {
    %c0_i32 = arith.constant 0 : i32
    %c0_i32_0 = arith.constant 0 : i32
    %c0_i32_1 = arith.constant 0 : i32
    return %c0_i32, %c0_i32_0 : i32, i32
  }
  func.func @transform_3(%arg0: i32) -> (i32, i32) {
    %c0_i32 = arith.constant 0 : i32
    %c0_i32_0 = arith.constant 0 : i32
    return %arg0, %c0_i32 : i32, i32
  }
}

</mosaic_0001>

<llo_original>
// kernel: tile.13
$region0: #{tile.13}
  #allocation0 [shape = 's32[1]{0}', space=sflag, size = 0x4, scoped, tag = 'scoped memory for tile.13']
  %s0 = inlined_call_operand.vmem [shape: f32[32], index: 0, kind: input, shape index: {}]
  %s1 = inlined_call_operand.vmem [shape: f32[4,32], index: 1, kind: output, shape index: {}]
  // Predicated region
  $region2: #{tile.13} parent=0 // pred_check
    _
  $region3: #{tile.13} parent=0 // pred_check_branch
    %3 = sbr.rel (0) target = $region5
  $region4: #{tile.13} parent=0 // pred_region
    _
  $region5: #{tile.13} parent=0 // pred_fallthru
    _
  %v4 = vld [vmem:[%s0] ss:$0 sm:$0xff]
  %5 = vst [vmem:[%s1] sm:$0xf] %v4

// kernel: tile.14
$region0: #{tile.14}
  %s0 = inlined_call_operand.vmem [shape: f32[4,32], index: 0, kind: input, shape index: {}]
  %s1 = inlined_call_operand.vmem [shape: f32[1,128], index: 1, kind: output, shape index: {}]
  $region1: #{tile.14} parent=0
    #allocation0 [shape = 'u8[4096]{0}', space=vmem, size = 0x1000, scoped, tag = 'scoped mem for output reshape']
    #allocation1 [shape = 'u8[4096]{0}', space=vmem, size = 0x1000, scoped, tag = 'scoped mem for input reshape']
    %s3 = sshll.u32 1, 4
    %s4 = ssub.s32 %s3, 1
    %v5 = vld [vmem:[%s0] sm:%s4]
    %6 = vst [vmem:[#allocation1] sm:%s4] %v5
    %v7 = vld [vmem:[#allocation1] sm:$0x1]
    %vm8 = vcmask 261120
    %9 = vst.msk [vmem:[#allocation0] sm:$0x1] %vm8, %v7
    %s10 = scalar_lea.vmem [#allocation1], 3
    %v11 = vld [vmem:[%s10] sm:$0x1]
    %12 = vrot.lane.b32.xlu0 %v11, 96
    %v13 = vpop.permute.xlu0 %12
    %vm14 = vcmask 1048320
    %15 = vst.msk [vmem:[#allocation0] sm:$0x1] %vm14, %v13
    %s16 = scalar_lea.vmem [#allocation1], 2
    %v17 = vld [vmem:[%s16] sm:$0x1]
    %18 = vrot.lane.b32.xlu0 %v17, 64
    %v19 = vpop.permute.xlu0 %18
    %vm20 = vcmask 785920
    %21 = vst.msk [vmem:[#allocation0] sm:$0x1] %vm20, %v19
    %s22 = scalar_lea.vmem [#allocation1], 1
    %v23 = vld [vmem:[%s22] sm:$0x1]
    %24 = vrot.lane.b32.xlu0 %v23, 32
    %v25 = vpop.permute.xlu0 %24
    %vm26 = vcmask 523520
    %27 = vst.msk [vmem:[#allocation0] sm:$0x1] %vm26, %v25
    %s29 = sshll.u32 1, 1
    %s30 = ssub.s32 %s29, 1
    %v32 = vld [vmem:[#allocation0] sm:%s30]
    %s33 = sshll.u32 1, 1
    %s34 = ssub.s32 %s33, 1
    %35 = vst [vmem:[%s1] sm:%s34] %v32

// kernel: decoder_forward_pallas.4
$region0: #{decoder_forward_pallas.4}
  #allocation0 [shape = 'u32[]', space=smem, size = 0x4, offset = 0x4, fixed_abs, tag = 'smem constant byte address 0x4 - core index']
  #allocation1 [shape = 'u32[144,128]{1,0:T(1,128)}', space=vmem, size = 0x12000, scoped, tag = 'internal scratch']
  %s0 = inlined_call_operand.vmem [shape: f32[32,72], index: 0, kind: input, shape index: {}]
  %s1 = inlined_call_operand.vmem [shape: f32[72,128], index: 1, kind: input, shape index: {}]
  %s2 = inlined_call_operand.vmem [shape: f32[1,128], index: 2, kind: input, shape index: {}]
  %s3 = inlined_call_operand.vmem [shape: f32[32,128], index: 3, kind: output, shape index: {}]
  %s4 = sld [smem:[#allocation0]]
  $region45: #{decoder_forward_pallas.4} parent=0
    _
  %s6 = ssub.s32 1, %s4
  %s7 = scalar_select 0, %s6, %s4
  loop: start=0, step=1, limit=4
  $region2: #{decoder_forward_pallas.4} parent=0 // loop_pre_header
    _
  $region3: #{decoder_forward_pallas.4} parent=0 // loop_header
    %s9 = sphi 0, %s13
    %p10 = scmp.ge.s32.totalorder %s9, 4
    %s19 = sphi 0, %s21
    %s22 = sphi 0, %s19
    %s23 = sphi 0, %s22
    %s39 = sphi 0, %s23
    %s43 = sphi 0, %s43
    %s45 = sphi 0, %s43
    %s46 = sphi 0, %s45
    %s60 = sphi 0, %s46
    %s64 = sphi 0, %s64
    %s66 = sphi 0, %s64
    %s67 = sphi 0, %s66
    %s81 = sphi 0, %s67
    %s87 = sphi 0, %s89
    %s90 = sphi 0, %s87
    %s91 = sphi 0, %s90
    %s107 = sphi 0, %s91
  $region4: #{decoder_forward_pallas.4} parent=0 // loop_header_branch
    %12 = sbr.rel (%p10) target = $region8
  $region5: #{decoder_forward_pallas.4} parent=0 // loop_body
    %s14 = ssub.s32 %s9, 1
    %s15 = ssub.s32 %s9, 2
    %s16 = sadd.s32 %s9, 1
    %s17 = ssub.s32 %s9, %s16
    %p18 = scmp.eq.s32.totalorder %s17, 0
    %s20 = sadd.s32 %s19, 1
    %s21 = scalar_select %p18, %s19, %s20
    %p24 = pneg %p18
    %p25 = scmp.eq.s32.totalorder %s9, 1
    %p26 = por %p24, %p25
    %p27 = scmp.ne.s32.totalorder %s19, %s22
    %p28 = scmp.eq.s32.totalorder %s9, 0
    %p29 = por %p27, %p28
    %p30 = scmp.ne.s32.totalorder %s19, %s22
    %p31 = scmp.eq.s32.totalorder %s14, 1
    %p32 = por %p30, %p31
    %p33 = scmp.ne.s32.totalorder %s22, %s23
    %p34 = scmp.eq.s32.totalorder %s14, 0
    %p35 = por %p33, %p34
    %p36 = scmp.ne.s32.totalorder %s22, %s23
    %p37 = scmp.eq.s32.totalorder %s15, 1
    %p38 = por %p36, %p37
    %p40 = scmp.ne.s32.totalorder %s23, %s39
    %p41 = scmp.eq.s32.totalorder %s15, 0
    %p42 = por %p40, %p41
    %s44 = sadd.s32 %s43, 1
    %p47 = scmp.eq.s32.totalorder %s9, 1
    %p48 = scmp.ne.s32.totalorder %s43, %s45
    %p49 = scmp.eq.s32.totalorder %s9, 0
    %p50 = por %p48, %p49
    %p51 = scmp.ne.s32.totalorder %s43, %s45
    %p52 = scmp.eq.s32.totalorder %s14, 1
    %p53 = por %p51, %p52
    %p54 = scmp.ne.s32.totalorder %s45, %s46
    %p55 = scmp.eq.s32.totalorder %s14, 0
    %p56 = por %p54, %p55
    %p57 = scmp.ne.s32.totalorder %s45, %s46
    %p58 = scmp.eq.s32.totalorder %s15, 1
    %p59 = por %p57, %p58
    %p61 = scmp.ne.s32.totalorder %s46, %s60
    %p62 = scmp.eq.s32.totalorder %s15, 0
    %p63 = por %p61, %p62
    %s65 = sadd.s32 %s64, 1
    %p68 = scmp.eq.s32.totalorder %s9, 1
    %p69 = scmp.ne.s32.totalorder %s64, %s66
    %p70 = scmp.eq.s32.totalorder %s9, 0
    %p71 = por %p69, %p70
    %p72 = scmp.ne.s32.totalorder %s64, %s66
    %p73 = scmp.eq.s32.totalorder %s14, 1
    %p74 = por %p72, %p73
    %p75 = scmp.ne.s32.totalorder %s66, %s67
    %p76 = scmp.eq.s32.totalorder %s14, 0
    %p77 = por %p75, %p76
    %p78 = scmp.ne.s32.totalorder %s66, %s67
    %p79 = scmp.eq.s32.totalorder %s15, 1
    %p80 = por %p78, %p79
    %p82 = scmp.ne.s32.totalorder %s67, %s81
    %p83 = scmp.eq.s32.totalorder %s15, 0
    %p84 = por %p82, %p83
    %s85 = ssub.s32 %s9, %s16
    %p86 = scmp.eq.s32.totalorder %s85, 0
    %s88 = sadd.s32 %s87, 1
    %s89 = scalar_select %p86, %s87, %s88
    %p92 = pneg %p86
    %p93 = scmp.eq.s32.totalorder %s9, 1
    %p94 = por %p92, %p93
    %p95 = scmp.ne.s32.totalorder %s87, %s90
    %p96 = scmp.eq.s32.totalorder %s9, 0
    %p97 = por %p95, %p96
    %p98 = scmp.ne.s32.totalorder %s87, %s90
    %p99 = scmp.eq.s32.totalorder %s14, 1
    %p100 = por %p98, %p99
    %p101 = scmp.ne.s32.totalorder %s90, %s91
    %p102 = scmp.eq.s32.totalorder %s14, 0
    %p103 = por %p101, %p102
    %p104 = scmp.ne.s32.totalorder %s90, %s91
    %p105 = scmp.eq.s32.totalorder %s15, 1
    %p106 = por %p104, %p105
    %p108 = scmp.ne.s32.totalorder %s91, %s107
    %p109 = scmp.eq.s32.totalorder %s15, 0
    %p110 = por %p108, %p109
    %p111 = scmp.le.s32.totalorder 1, %s9
    %p112 = scmp.lt.s32.totalorder %s9, 3
    %p113 = pnand %p111, %p112
    %p114 = pneg %p113
    // Predicated region
    $region9: #{decoder_forward_pallas.4} parent=5 // pred_check
      _
    $region10: #{decoder_forward_pallas.4} parent=5 // pred_check_branch
      %116 = sbr.rel (%p113) target = $region12
    $region11: #{decoder_forward_pallas.4} parent=5 // pred_region
      %s117 = ssub.s32 %s9, 1
      // Predicated region
      $region13: #{decoder_forward_pallas.4} parent=11 // pred_check
        %p118 = pneg %p56
      $region14: #{decoder_forward_pallas.4} parent=11 // pred_check_branch
        %120 = sbr.rel (%p118) target = $region16
      $region15: #{decoder_forward_pallas.4} parent=11 // pred_region
        _
      $region16: #{decoder_forward_pallas.4} parent=11 // pred_fallthru
        _
      // Predicated region
      $region17: #{decoder_forward_pallas.4} parent=11 // pred_check
        %p121 = pneg %p77
      $region18: #{decoder_forward_pallas.4} parent=11 // pred_check_branch
        %123 = sbr.rel (%p121) target = $region20
      $region19: #{decoder_forward_pallas.4} parent=11 // pred_region
        _
      $region20: #{decoder_forward_pallas.4} parent=11 // pred_fallthru
        _
    $region12: #{decoder_forward_pallas.4} parent=5 // pred_fallthru
      _
    %p124 = scmp.lt.s32.totalorder %s9, 2
    // Predicated region
    $region21: #{decoder_forward_pallas.4} parent=5 // pred_check
      %p125 = pneg %p124
    $region22: #{decoder_forward_pallas.4} parent=5 // pred_check_branch
      %127 = sbr.rel (%p125) target = $region24
    $region23: #{decoder_forward_pallas.4} parent=5 // pred_region
      // Predicated region
      $region25: #{decoder_forward_pallas.4} parent=23 // pred_check
        %p128 = pneg %p29
      $region26: #{decoder_forward_pallas.4} parent=23 // pred_check_branch
        %130 = sbr.rel (%p128) target = $region28
      $region27: #{decoder_forward_pallas.4} parent=23 // pred_region
        %s131 = smul.u32 2, %s9
        %p132 = scmp.lt.s32.totalorder %s131, 3
        %s133 = scalar_select %p132, %s131, 3
        %s134 = smul.addr %s133, 8
        %s135 = scalar_lea.vmem %s0, %s134
        %s136 = smul.u32 2, %s9
      $region28: #{decoder_forward_pallas.4} parent=23 // pred_fallthru
        _
    $region24: #{decoder_forward_pallas.4} parent=5 // pred_fallthru
      _
    %p137 = scmp.le.s32.totalorder 1, %s9
    %p138 = scmp.lt.s32.totalorder %s9, 3
    %p139 = pnand %p137, %p138
    %p140 = pneg %p139
    // Predicated region
    $region29: #{decoder_forward_pallas.4} parent=5 // pred_check
      _
    $region30: #{decoder_forward_pallas.4} parent=5 // pred_check_branch
      %142 = sbr.rel (%p139) target = $region32
    $region31: #{decoder_forward_pallas.4} parent=5 // pred_region
      %s143 = ssub.s32 %s9, 1
      %s144 = smul.u32 2, %s14
      %p145 = scmp.lt.s32.totalorder %s144, 3
      %s146 = scalar_select %p145, %s144, 3
      %s147 = smul.addr %s146, 8
      %s148 = scalar_lea.vmem %s0, %s147
      %p149 = pneg %p35
      %p150 = pneg %p32
      %p151 = pneg %p56
      %p152 = pneg %p53
      %p153 = pneg %p77
      %p154 = pneg %p74
      %p155 = pneg %p103
      %p156 = pneg %p100
      %s157 = smul.u32 2, %s14
      %p158 = scmp.lt.s32.totalorder %s157, 3
      %s159 = scalar_select %p158, %s157, 3
      %s160 = smul.addr %s159, 8
      %s161 = scalar_lea.vmem %s3, %s160
      %s162 = smul.u32 2, %s14
      %p163 = scmp.lt.s32.totalorder %s162, 3
      %s164 = scalar_select %p163, %s162, 3
      %s165 = smul.addr %s164, 8
      %s166 = scalar_lea.vmem %s0, %s165
      %s167 = smul.u32 2, %s14
      %s168 = smul.u32 2, %s14
      %p169 = scmp.lt.s32.totalorder %s168, 3
      %s170 = scalar_select %p169, %s168, 3
      %s171 = smul.addr %s170, 8
      %s172 = scalar_lea.vmem %s3, %s171
      %s173 = smul.u32 2, %s14
      %v174 = vld [vmem:[%s166] sm:$0xff]
      %v175 = vld [vmem:[%s166 + $0x8] sm:$0xff]
      %v176 = vmax.f32 %v174, 0.0
      %v177 = vmax.f32 %v175, 0.0
      %v178 = vld [vmem:[%s1] sm:$0xff]
      %v179 = vld [vmem:[%s1 + $0x8] sm:$0xff]
      %v180 = vld [vmem:[%s1 + $0x10] sm:$0xff]
      %v181 = vld [vmem:[%s1 + $0x18] sm:$0xff]
      %v182 = vld [vmem:[%s1 + $0x20] sm:$0xff]
      %v183 = vld [vmem:[%s1 + $0x28] sm:$0xff]
      %v184 = vld [vmem:[%s1 + $0x30] sm:$0xff]
      %v185 = vld [vmem:[%s1 + $0x38] sm:$0xff]
      %v186 = vld [vmem:[%s1 + $0x40] sm:$0xff]
      %v187 = vld [vmem:[%s2] sm:$0x1]
      %v189 = vlaneseq
      %v190 = vshrl.u32 %v189, 7
      %v191 = vsub.s32 0, %v190
      %v192 = vrot.slane %v187, %v191
      %vm194 = vcmask 588800
      %v196 = vsel %vm194, %v176, 0
      %v199 = vsel %vm194, %v177, 0
      %201 = vmatprep.subr.mxu0 0.0
      %202 = vmatpush1.msra.mxu0 0.0
      %203 = vmatprep.subr.mxu0 0.0
      %204 = vmatpush1.msra.mxu0 0.0
      %205 = vmatprep.subr.mxu0 0.0
      %206 = vmatpush1.msra.mxu0 0.0
      %207 = vmatprep.subr.mxu0 0.0
      %208 = vmatpush1.msra.mxu0 0.0
      %209 = vmatprep.subr.mxu0 0.0
      %210 = vmatpush1.msra.mxu0 0.0
      %211 = vmatprep.subr.mxu0 0.0
      %212 = vmatpush1.msra.mxu0 0.0
      %213 = vmatprep.subr.mxu0 0.0
      %214 = vmatpush1.msra.mxu0 0.0
      %215 = vmatprep.subr.mxu0 0.0
      %216 = vmatpush1.msra.mxu0 %v186
      %217 = vmatprep.subr.mxu0 0.0
      %218 = vmatpush1.msra.mxu0 %v185
      %219 = vmatprep.subr.mxu0 0.0
      %220 = vmatpush1.msra.mxu0 %v184
      %221 = vmatprep.subr.mxu0 0.0
      %222 = vmatpush1.msra.mxu0 %v183
      %223 = vmatprep.subr.mxu0 0.0
      %224 = vmatpush1.msra.mxu0 %v182
      %225 = vmatprep.subr.mxu0 0.0
      %226 = vmatpush1.msra.mxu0 %v181
      %227 = vmatprep.subr.mxu0 0.0
      %228 = vmatpush1.msra.mxu0 %v180
      %229 = vmatprep.subr.mxu0 0.0
      %230 = vmatpush1.msra.mxu0 %v179
      %231 = vmatprep.subr.mxu0 0.0
      %232 = vmatpush1.msra.mxu0 %v178
      %233 = vmatprep.subr.mxu0 0.0
      %234 = vmatpush2.msra.mxu0 0.0
      %235 = vmatprep.subr.mxu0 0.0
      %236 = vmatpush2.msra.mxu0 0.0
      %237 = vmatprep.subr.mxu0 0.0
      %238 = vmatpush2.msra.mxu0 0.0
      %239 = vmatprep.subr.mxu0 0.0
      %240 = vmatpush2.msra.mxu0 0.0
      %241 = vmatprep.subr.mxu0 0.0
      %242 = vmatpush2.msra.mxu0 0.0
      %243 = vmatprep.subr.mxu0 0.0
      %244 = vmatpush2.msra.mxu0 0.0
      %245 = vmatprep.subr.mxu0 0.0
      %246 = vmatpush2.msra.mxu0 0.0
      %247 = vmatprep.subr.mxu0 0.0
      %248 = vmatpush2.msra.mxu0 0.0
      %249 = vmatprep.subr.mxu0 0.0
      %250 = vmatpush2.msra.mxu0 0.0
      %251 = vmatprep.subr.mxu0 0.0
      %252 = vmatpush2.msra.mxu0 0.0
      %253 = vmatprep.subr.mxu0 0.0
      %254 = vmatpush2.msra.mxu0 0.0
      %255 = vmatprep.subr.mxu0 0.0
      %256 = vmatpush2.msra.mxu0 0.0
      %257 = vmatprep.subr.mxu0 0.0
      %258 = vmatpush2.msra.mxu0 0.0
      %259 = vmatprep.subr.mxu0 0.0
      %260 = vmatpush2.msra.mxu0 0.0
      %261 = vmatprep.subr.mxu0 0.0
      %262 = vmatpush2.msra.mxu0 0.0
      %263 = vmatprep.subr.mxu0 0.0
      %264 = vmatpush2.msra.mxu0 0.0
      %265 = vmatprep.mubr.f32.mxu0 0.0
      %266 = vmatmul.mubr.f32.gmra.mxu0 %v196
      %v267 = vpop.f32.mrf.mxu0
      %v268 = vadd.f32 %v192, %v267
      %v269 = vpop.f32.mrf.mxu0
      %270 = vmatprep.mubr.f32.mxu0 0.0
      %271 = vmatmul.mubr.f32.gmra.mxu0 %v199
      %v272 = vpop.f32.mrf.mxu0
      %v273 = vadd.f32 %v192, %v272
      %v274 = vpop.f32.mrf.mxu0
      %275 = vdwg.mxu0
      %276 = vst [vmem:[%s172] sm:$0xff] %v268
      %277 = vst [vmem:[%s172 + $0x8] sm:$0xff] %v273
      %s278 = smul.u32 2, %s14
      %p279 = scmp.lt.s32.totalorder %s278, 3
      %s280 = scalar_select %p279, %s278, 3
      %s281 = smul.addr %s280, 8
      %s282 = scalar_lea.vmem %s3, %s281
      // Predicated region
      $region33: #{decoder_forward_pallas.4} parent=31 // pred_check
        %p283 = pneg %p100
      $region34: #{decoder_forward_pallas.4} parent=31 // pred_check_branch
        %285 = sbr.rel (%p283) target = $region36
      $region35: #{decoder_forward_pallas.4} parent=31 // pred_region
        %s286 = smul.u32 2, %s14
      $region36: #{decoder_forward_pallas.4} parent=31 // pred_fallthru
        _
    $region32: #{decoder_forward_pallas.4} parent=5 // pred_fallthru
      _
    %p287 = scmp.le.s32.totalorder 2, %s9
    // Predicated region
    $region37: #{decoder_forward_pallas.4} parent=5 // pred_check
      %p288 = pneg %p287
    $region38: #{decoder_forward_pallas.4} parent=5 // pred_check_branch
      %290 = sbr.rel (%p288) target = $region40
    $region39: #{decoder_forward_pallas.4} parent=5 // pred_region
      %s291 = ssub.s32 %s9, 2
      // Predicated region
      $region41: #{decoder_forward_pallas.4} parent=39 // pred_check
        %p292 = pneg %p106
      $region42: #{decoder_forward_pallas.4} parent=39 // pred_check_branch
        %294 = sbr.rel (%p292) target = $region44
      $region43: #{decoder_forward_pallas.4} parent=39 // pred_region
        %s295 = smul.u32 2, %s15
        %p296 = scmp.lt.s32.totalorder %s295, 3
        %s297 = scalar_select %p296, %s295, 3
        %s298 = smul.addr %s297, 8
        %s299 = scalar_lea.vmem %s3, %s298
      $region44: #{decoder_forward_pallas.4} parent=39 // pred_fallthru
        _
    $region40: #{decoder_forward_pallas.4} parent=5 // pred_fallthru
      _
  $region6: #{decoder_forward_pallas.4} parent=0 // loop_footer
    %s13 = sadd.s32 1, %s9
  $region7: #{decoder_forward_pallas.4} parent=0 // loop_footer_branch
    %8 = sbr.rel target = $region3
  $region8: #{decoder_forward_pallas.4} parent=0 // loop_exit
    _

// kernel: decoder_forward_pallas.3
$region0: #{decoder_forward_pallas.3}
  #allocation0 [shape = 'u32[]', space=smem, size = 0x4, offset = 0x4, fixed_abs, tag = 'smem constant byte address 0x4 - core index']
  #allocation1 [shape = 'u32[144,128]{1,0:T(1,128)}', space=vmem, size = 0x12000, scoped, tag = 'internal scratch']
  %s0 = inlined_call_operand.vmem [shape: f32[8,32], index: 0, kind: input, shape index: {}]
  %s1 = inlined_call_operand.vmem [shape: f32[32,128], index: 1, kind: input, shape index: {}]
  %s2 = inlined_call_operand.vmem [shape: f32[1,128], index: 2, kind: input, shape index: {}]
  %s3 = inlined_call_operand.vmem [shape: f32[8,128], index: 3, kind: output, shape index: {}]
  %s4 = sld [smem:[#allocation0]]
  $region22: #{decoder_forward_pallas.3} parent=0
    _
  %s6 = ssub.s32 1, %s4
  %s7 = scalar_select 0, %s6, %s4
  // Predicated region
  $region2: #{decoder_forward_pallas.3} parent=0 // pred_check
    _
  $region3: #{decoder_forward_pallas.3} parent=0 // pred_check_branch
    %9 = sbr.rel (0) target = $region5
  $region4: #{decoder_forward_pallas.3} parent=0 // pred_region
    _
  $region5: #{decoder_forward_pallas.3} parent=0 // pred_fallthru
    _
  // Predicated region
  $region6: #{decoder_forward_pallas.3} parent=0 // pred_check
    _
  $region7: #{decoder_forward_pallas.3} parent=0 // pred_check_branch
    %11 = sbr.rel (0) target = $region9
  $region8: #{decoder_forward_pallas.3} parent=0 // pred_region
    _
  $region9: #{decoder_forward_pallas.3} parent=0 // pred_fallthru
    _
  // Predicated region
  $region10: #{decoder_forward_pallas.3} parent=0 // pred_check
    _
  $region11: #{decoder_forward_pallas.3} parent=0 // pred_check_branch
    %13 = sbr.rel (0) target = $region13
  $region12: #{decoder_forward_pallas.3} parent=0 // pred_region
    _
  $region13: #{decoder_forward_pallas.3} parent=0 // pred_fallthru
    _
  %v14 = vld [vmem:[%s0] sm:$0xff]
  %v15 = vld [vmem:[%s1] sm:$0xff]
  %v16 = vld [vmem:[%s1 + $0x8] sm:$0xff]
  %v17 = vld [vmem:[%s1 + $0x10] sm:$0xff]
  %v18 = vld [vmem:[%s1 + $0x18] sm:$0xff]
  %v19 = vld [vmem:[%s2] sm:$0x1]
  %v21 = vlaneseq
  %v22 = vshrl.u32 %v21, 7
  %v23 = vsub.s32 0, %v22
  %v24 = vrot.slane %v19, %v23
  %vm26 = vcmask 261120
  %v28 = vsel %vm26, %v14, 0
  %30 = vmatprep.subr.mxu0 0.0
  %31 = vmatpush1.msra.mxu0 0.0
  %32 = vmatprep.subr.mxu0 0.0
  %33 = vmatpush1.msra.mxu0 0.0
  %34 = vmatprep.subr.mxu0 0.0
  %35 = vmatpush1.msra.mxu0 0.0
  %36 = vmatprep.subr.mxu0 0.0
  %37 = vmatpush1.msra.mxu0 0.0
  %38 = vmatprep.subr.mxu0 0.0
  %39 = vmatpush1.msra.mxu0 0.0
  %40 = vmatprep.subr.mxu0 0.0
  %41 = vmatpush1.msra.mxu0 0.0
  %42 = vmatprep.subr.mxu0 0.0
  %43 = vmatpush1.msra.mxu0 0.0
  %44 = vmatprep.subr.mxu0 0.0
  %45 = vmatpush1.msra.mxu0 0.0
  %46 = vmatprep.subr.mxu0 0.0
  %47 = vmatpush1.msra.mxu0 0.0
  %48 = vmatprep.subr.mxu0 0.0
  %49 = vmatpush1.msra.mxu0 0.0
  %50 = vmatprep.subr.mxu0 0.0
  %51 = vmatpush1.msra.mxu0 0.0
  %52 = vmatprep.subr.mxu0 0.0
  %53 = vmatpush1.msra.mxu0 0.0
  %54 = vmatprep.subr.mxu0 0.0
  %55 = vmatpush1.msra.mxu0 %v18
  %56 = vmatprep.subr.mxu0 0.0
  %57 = vmatpush1.msra.mxu0 %v17
  %58 = vmatprep.subr.mxu0 0.0
  %59 = vmatpush1.msra.mxu0 %v16
  %60 = vmatprep.subr.mxu0 0.0
  %61 = vmatpush1.msra.mxu0 %v15
  %62 = vmatprep.subr.mxu0 0.0
  %63 = vmatpush2.msra.mxu0 0.0
  %64 = vmatprep.subr.mxu0 0.0
  %65 = vmatpush2.msra.mxu0 0.0
  %66 = vmatprep.subr.mxu0 0.0
  %67 = vmatpush2.msra.mxu0 0.0
  %68 = vmatprep.subr.mxu0 0.0
  %69 = vmatpush2.msra.mxu0 0.0
  %70 = vmatprep.subr.mxu0 0.0
  %71 = vmatpush2.msra.mxu0 0.0
  %72 = vmatprep.subr.mxu0 0.0
  %73 = vmatpush2.msra.mxu0 0.0
  %74 = vmatprep.subr.mxu0 0.0
  %75 = vmatpush2.msra.mxu0 0.0
  %76 = vmatprep.subr.mxu0 0.0
  %77 = vmatpush2.msra.mxu0 0.0
  %78 = vmatprep.subr.mxu0 0.0
  %79 = vmatpush2.msra.mxu0 0.0
  %80 = vmatprep.subr.mxu0 0.0
  %81 = vmatpush2.msra.mxu0 0.0
  %82 = vmatprep.subr.mxu0 0.0
  %83 = vmatpush2.msra.mxu0 0.0
  %84 = vmatprep.subr.mxu0 0.0
  %85 = vmatpush2.msra.mxu0 0.0
  %86 = vmatprep.subr.mxu0 0.0
  %87 = vmatpush2.msra.mxu0 0.0
  %88 = vmatprep.subr.mxu0 0.0
  %89 = vmatpush2.msra.mxu0 0.0
  %90 = vmatprep.subr.mxu0 0.0
  %91 = vmatpush2.msra.mxu0 0.0
  %92 = vmatprep.subr.mxu0 0.0
  %93 = vmatpush2.msra.mxu0 0.0
  %94 = vmatprep.mubr.f32.mxu0 0.0
  %95 = vmatmul.mubr.f32.gmra.mxu0 %v28
  %v96 = vpop.f32.mrf.mxu0
  %v97 = vadd.f32 %v24, %v96
  %v98 = vpop.f32.mrf.mxu0
  %99 = vdwg.mxu0
  %100 = vst [vmem:[%s3] sm:$0xff] %v97
  // Predicated region
  $region14: #{decoder_forward_pallas.3} parent=0 // pred_check
    _
  $region15: #{decoder_forward_pallas.3} parent=0 // pred_check_branch
    %102 = sbr.rel (0) target = $region17
  $region16: #{decoder_forward_pallas.3} parent=0 // pred_region
    _
  $region17: #{decoder_forward_pallas.3} parent=0 // pred_fallthru
    _
  // Predicated region
  $region18: #{decoder_forward_pallas.3} parent=0 // pred_check
    _
  $region19: #{decoder_forward_pallas.3} parent=0 // pred_check_branch
    %104 = sbr.rel (0) target = $region21
  $region20: #{decoder_forward_pallas.3} parent=0 // pred_region
    _
  $region21: #{decoder_forward_pallas.3} parent=0 // pred_fallthru
    _

// kernel: decoder_forward_pallas.5
$region0: #{decoder_forward_pallas.5}
  #allocation0 [shape = 'u32[]', space=smem, size = 0x4, offset = 0x4, fixed_abs, tag = 'smem constant byte address 0x4 - core index']
  #allocation1 [shape = 'u32[144,128]{1,0:T(1,128)}', space=vmem, size = 0x12000, scoped, tag = 'internal scratch']
  %s0 = inlined_call_operand.vmem [shape: f32[128,288], index: 0, kind: input, shape index: {}]
  %s1 = inlined_call_operand.vmem [shape: f32[288,128], index: 1, kind: input, shape index: {}]
  %s2 = inlined_call_operand.vmem [shape: f32[1,128], index: 2, kind: input, shape index: {}]
  %s3 = inlined_call_operand.vmem [shape: f32[128,128], index: 3, kind: output, shape index: {}]
  %s4 = sld [smem:[#allocation0]]
  $region45: #{decoder_forward_pallas.5} parent=0
    _
  %s6 = ssub.s32 1, %s4
  %s7 = scalar_select 0, %s6, %s4
  loop: start=0, step=1, limit=4
  $region2: #{decoder_forward_pallas.5} parent=0 // loop_pre_header
    _
  $region3: #{decoder_forward_pallas.5} parent=0 // loop_header
    %s9 = sphi 0, %s13
    %p10 = scmp.ge.s32.totalorder %s9, 4
    %s19 = sphi 0, %s21
    %s22 = sphi 0, %s19
    %s23 = sphi 0, %s22
    %s39 = sphi 0, %s23
    %s43 = sphi 0, %s43
    %s45 = sphi 0, %s43
    %s46 = sphi 0, %s45
    %s60 = sphi 0, %s46
    %s64 = sphi 0, %s64
    %s66 = sphi 0, %s64
    %s67 = sphi 0, %s66
    %s81 = sphi 0, %s67
    %s87 = sphi 0, %s89
    %s90 = sphi 0, %s87
    %s91 = sphi 0, %s90
    %s107 = sphi 0, %s91
  $region4: #{decoder_forward_pallas.5} parent=0 // loop_header_branch
    %12 = sbr.rel (%p10) target = $region8
  $region5: #{decoder_forward_pallas.5} parent=0 // loop_body
    %s14 = ssub.s32 %s9, 1
    %s15 = ssub.s32 %s9, 2
    %s16 = sadd.s32 %s9, 1
    %s17 = ssub.s32 %s9, %s16
    %p18 = scmp.eq.s32.totalorder %s17, 0
    %s20 = sadd.s32 %s19, 1
    %s21 = scalar_select %p18, %s19, %s20
    %p24 = pneg %p18
    %p25 = scmp.eq.s32.totalorder %s9, 1
    %p26 = por %p24, %p25
    %p27 = scmp.ne.s32.totalorder %s19, %s22
    %p28 = scmp.eq.s32.totalorder %s9, 0
    %p29 = por %p27, %p28
    %p30 = scmp.ne.s32.totalorder %s19, %s22
    %p31 = scmp.eq.s32.totalorder %s14, 1
    %p32 = por %p30, %p31
    %p33 = scmp.ne.s32.totalorder %s22, %s23
    %p34 = scmp.eq.s32.totalorder %s14, 0
    %p35 = por %p33, %p34
    %p36 = scmp.ne.s32.totalorder %s22, %s23
    %p37 = scmp.eq.s32.totalorder %s15, 1
    %p38 = por %p36, %p37
    %p40 = scmp.ne.s32.totalorder %s23, %s39
    %p41 = scmp.eq.s32.totalorder %s15, 0
    %p42 = por %p40, %p41
    %s44 = sadd.s32 %s43, 1
    %p47 = scmp.eq.s32.totalorder %s9, 1
    %p48 = scmp.ne.s32.totalorder %s43, %s45
    %p49 = scmp.eq.s32.totalorder %s9, 0
    %p50 = por %p48, %p49
    %p51 = scmp.ne.s32.totalorder %s43, %s45
    %p52 = scmp.eq.s32.totalorder %s14, 1
    %p53 = por %p51, %p52
    %p54 = scmp.ne.s32.totalorder %s45, %s46
    %p55 = scmp.eq.s32.totalorder %s14, 0
    %p56 = por %p54, %p55
    %p57 = scmp.ne.s32.totalorder %s45, %s46
    %p58 = scmp.eq.s32.totalorder %s15, 1
    %p59 = por %p57, %p58
    %p61 = scmp.ne.s32.totalorder %s46, %s60
    %p62 = scmp.eq.s32.totalorder %s15, 0
    %p63 = por %p61, %p62
    %s65 = sadd.s32 %s64, 1
    %p68 = scmp.eq.s32.totalorder %s9, 1
    %p69 = scmp.ne.s32.totalorder %s64, %s66
    %p70 = scmp.eq.s32.totalorder %s9, 0
    %p71 = por %p69, %p70
    %p72 = scmp.ne.s32.totalorder %s64, %s66
    %p73 = scmp.eq.s32.totalorder %s14, 1
    %p74 = por %p72, %p73
    %p75 = scmp.ne.s32.totalorder %s66, %s67
    %p76 = scmp.eq.s32.totalorder %s14, 0
    %p77 = por %p75, %p76
    %p78 = scmp.ne.s32.totalorder %s66, %s67
    %p79 = scmp.eq.s32.totalorder %s15, 1
    %p80 = por %p78, %p79
    %p82 = scmp.ne.s32.totalorder %s67, %s81
    %p83 = scmp.eq.s32.totalorder %s15, 0
    %p84 = por %p82, %p83
    %s85 = ssub.s32 %s9, %s16
    %p86 = scmp.eq.s32.totalorder %s85, 0
    %s88 = sadd.s32 %s87, 1
    %s89 = scalar_select %p86, %s87, %s88
    %p92 = pneg %p86
    %p93 = scmp.eq.s32.totalorder %s9, 1
    %p94 = por %p92, %p93
    %p95 = scmp.ne.s32.totalorder %s87, %s90
    %p96 = scmp.eq.s32.totalorder %s9, 0
    %p97 = por %p95, %p96
    %p98 = scmp.ne.s32.totalorder %s87, %s90
    %p99 = scmp.eq.s32.totalorder %s14, 1
    %p100 = por %p98, %p99
    %p101 = scmp.ne.s32.totalorder %s90, %s91
    %p102 = scmp.eq.s32.totalorder %s14, 0
    %p103 = por %p101, %p102
    %p104 = scmp.ne.s32.totalorder %s90, %s91
    %p105 = scmp.eq.s32.totalorder %s15, 1
    %p106 = por %p104, %p105
    %p108 = scmp.ne.s32.totalorder %s91, %s107
    %p109 = scmp.eq.s32.totalorder %s15, 0
    %p110 = por %p108, %p109
    %p111 = scmp.le.s32.totalorder 1, %s9
    %p112 = scmp.lt.s32.totalorder %s9, 3
    %p113 = pnand %p111, %p112
    %p114 = pneg %p113
    // Predicated region
    $region9: #{decoder_forward_pallas.5} parent=5 // pred_check
      _
    $region10: #{decoder_forward_pallas.5} parent=5 // pred_check_branch
      %116 = sbr.rel (%p113) target = $region12
    $region11: #{decoder_forward_pallas.5} parent=5 // pred_region
      %s117 = ssub.s32 %s9, 1
      // Predicated region
      $region13: #{decoder_forward_pallas.5} parent=11 // pred_check
        %p118 = pneg %p56
      $region14: #{decoder_forward_pallas.5} parent=11 // pred_check_branch
        %120 = sbr.rel (%p118) target = $region16
      $region15: #{decoder_forward_pallas.5} parent=11 // pred_region
        _
      $region16: #{decoder_forward_pallas.5} parent=11 // pred_fallthru
        _
      // Predicated region
      $region17: #{decoder_forward_pallas.5} parent=11 // pred_check
        %p121 = pneg %p77
      $region18: #{decoder_forward_pallas.5} parent=11 // pred_check_branch
        %123 = sbr.rel (%p121) target = $region20
      $region19: #{decoder_forward_pallas.5} parent=11 // pred_region
        _
      $region20: #{decoder_forward_pallas.5} parent=11 // pred_fallthru
        _
    $region12: #{decoder_forward_pallas.5} parent=5 // pred_fallthru
      _
    %p124 = scmp.lt.s32.totalorder %s9, 2
    // Predicated region
    $region21: #{decoder_forward_pallas.5} parent=5 // pred_check
      %p125 = pneg %p124
    $region22: #{decoder_forward_pallas.5} parent=5 // pred_check_branch
      %127 = sbr.rel (%p125) target = $region24
    $region23: #{decoder_forward_pallas.5} parent=5 // pred_region
      // Predicated region
      $region25: #{decoder_forward_pallas.5} parent=23 // pred_check
        %p128 = pneg %p29
      $region26: #{decoder_forward_pallas.5} parent=23 // pred_check_branch
        %130 = sbr.rel (%p128) target = $region28
      $region27: #{decoder_forward_pallas.5} parent=23 // pred_region
        %s131 = smul.u32 8, %s9
        %p132 = scmp.lt.s32.totalorder %s131, 15
        %s133 = scalar_select %p132, %s131, 15
        %s134 = smul.addr %s133, 3
        %s135 = smul.addr %s134, 8
        %s136 = scalar_lea.vmem %s0, %s135
        %s137 = smul.u32 8, %s9
      $region28: #{decoder_forward_pallas.5} parent=23 // pred_fallthru
        _
    $region24: #{decoder_forward_pallas.5} parent=5 // pred_fallthru
      _
    %p138 = scmp.le.s32.totalorder 1, %s9
    %p139 = scmp.lt.s32.totalorder %s9, 3
    %p140 = pnand %p138, %p139
    %p141 = pneg %p140
    // Predicated region
    $region29: #{decoder_forward_pallas.5} parent=5 // pred_check
      _
    $region30: #{decoder_forward_pallas.5} parent=5 // pred_check_branch
      %143 = sbr.rel (%p140) target = $region32
    $region31: #{decoder_forward_pallas.5} parent=5 // pred_region
      %s144 = ssub.s32 %s9, 1
      %s145 = smul.u32 8, %s14
      %p146 = scmp.lt.s32.totalorder %s145, 15
      %s147 = scalar_select %p146, %s145, 15
      %s148 = smul.addr %s147, 3
      %s149 = smul.addr %s148, 8
      %s150 = scalar_lea.vmem %s0, %s149
      %p151 = pneg %p35
      %p152 = pneg %p32
      %p153 = pneg %p56
      %p154 = pneg %p53
      %p155 = pneg %p77
      %p156 = pneg %p74
      %p157 = pneg %p103
      %p158 = pneg %p100
      %s159 = smul.u32 8, %s14
      %p160 = scmp.lt.s32.totalorder %s159, 15
      %s161 = scalar_select %p160, %s159, 15
      %s162 = smul.addr %s161, 8
      %s163 = scalar_lea.vmem %s3, %s162
      %s164 = smul.u32 8, %s14
      %p165 = scmp.lt.s32.totalorder %s164, 15
      %s166 = scalar_select %p165, %s164, 15
      %s167 = smul.addr %s166, 3
      %s168 = smul.addr %s167, 8
      %s169 = scalar_lea.vmem %s0, %s168
      %s170 = smul.u32 8, %s14
      %s171 = smul.u32 8, %s14
      %p172 = scmp.lt.s32.totalorder %s171, 15
      %s173 = scalar_select %p172, %s171, 15
      %s174 = smul.addr %s173, 8
      %s175 = scalar_lea.vmem %s3, %s174
      %s176 = smul.u32 8, %s14
      %v177 = vld [vmem:[%s169] sm:$0xff]
      %v178 = vld [vmem:[%s169 + $0x8] sm:$0xff]
      %v179 = vld [vmem:[%s169 + $0x10] sm:$0xff]
      %v180 = vld [vmem:[%s169 + $0x18] sm:$0xff]
      %v181 = vld [vmem:[%s169 + $0x20] sm:$0xff]
      %v182 = vld [vmem:[%s169 + $0x28] sm:$0xff]
      %v183 = vld [vmem:[%s169 + $0x30] sm:$0xff]
      %v184 = vld [vmem:[%s169 + $0x38] sm:$0xff]
      %v185 = vld [vmem:[%s169 + $0x40] sm:$0xff]
      %v186 = vld [vmem:[%s169 + $0x48] sm:$0xff]
      %v187 = vld [vmem:[%s169 + $0x50] sm:$0xff]
      %v188 = vld [vmem:[%s169 + $0x58] sm:$0xff]
      %v189 = vld [vmem:[%s169 + $0x60] sm:$0xff]
      %v190 = vld [vmem:[%s169 + $0x68] sm:$0xff]
      %v191 = vld [vmem:[%s169 + $0x70] sm:$0xff]
      %v192 = vld [vmem:[%s169 + $0x78] sm:$0xff]
      %v193 = vld [vmem:[%s169 + $0x80] sm:$0xff]
      %v194 = vld [vmem:[%s169 + $0x88] sm:$0xff]
      %v195 = vld [vmem:[%s169 + $0x90] sm:$0xff]
      %v196 = vld [vmem:[%s169 + $0x98] sm:$0xff]
      %v197 = vld [vmem:[%s169 + $0xa0] sm:$0xff]
      %v198 = vld [vmem:[%s169 + $0xa8] sm:$0xff]
      %v199 = vld [vmem:[%s169 + $0xb0] sm:$0xff]
      %v200 = vld [vmem:[%s169 + $0xb8] sm:$0xff]
      %v201 = vmax.f32 %v177, 0.0
      %v202 = vmax.f32 %v178, 0.0
      %v203 = vmax.f32 %v179, 0.0
      %v204 = vmax.f32 %v180, 0.0
      %v205 = vmax.f32 %v181, 0.0
      %v206 = vmax.f32 %v182, 0.0
      %v207 = vmax.f32 %v183, 0.0
      %v208 = vmax.f32 %v184, 0.0
      %v209 = vmax.f32 %v185, 0.0
      %v210 = vmax.f32 %v186, 0.0
      %v211 = vmax.f32 %v187, 0.0
      %v212 = vmax.f32 %v188, 0.0
      %v213 = vmax.f32 %v189, 0.0
      %v214 = vmax.f32 %v190, 0.0
      %v215 = vmax.f32 %v191, 0.0
      %v216 = vmax.f32 %v192, 0.0
      %v217 = vmax.f32 %v193, 0.0
      %v218 = vmax.f32 %v194, 0.0
      %v219 = vmax.f32 %v195, 0.0
      %v220 = vmax.f32 %v196, 0.0
      %v221 = vmax.f32 %v197, 0.0
      %v222 = vmax.f32 %v198, 0.0
      %v223 = vmax.f32 %v199, 0.0
      %v224 = vmax.f32 %v200, 0.0
      %v225 = vld [vmem:[%s1] sm:$0xff]
      %v226 = vld [vmem:[%s1 + $0x8] sm:$0xff]
      %v227 = vld [vmem:[%s1 + $0x10] sm:$0xff]
      %v228 = vld [vmem:[%s1 + $0x18] sm:$0xff]
      %v229 = vld [vmem:[%s1 + $0x20] sm:$0xff]
      %v230 = vld [vmem:[%s1 + $0x28] sm:$0xff]
      %v231 = vld [vmem:[%s1 + $0x30] sm:$0xff]
      %v232 = vld [vmem:[%s1 + $0x38] sm:$0xff]
      %v233 = vld [vmem:[%s1 + $0x40] sm:$0xff]
      %v234 = vld [vmem:[%s1 + $0x48] sm:$0xff]
      %v235 = vld [vmem:[%s1 + $0x50] sm:$0xff]
      %v236 = vld [vmem:[%s1 + $0x58] sm:$0xff]
      %v237 = vld [vmem:[%s1 + $0x60] sm:$0xff]
      %v238 = vld [vmem:[%s1 + $0x68] sm:$0xff]
      %v239 = vld [vmem:[%s1 + $0x70] sm:$0xff]
      %v240 = vld [vmem:[%s1 + $0x78] sm:$0xff]
      %v241 = vld [vmem:[%s1 + $0x80] sm:$0xff]
      %v242 = vld [vmem:[%s1 + $0x88] sm:$0xff]
      %v243 = vld [vmem:[%s1 + $0x90] sm:$0xff]
      %v244 = vld [vmem:[%s1 + $0x98] sm:$0xff]
      %v245 = vld [vmem:[%s1 + $0xa0] sm:$0xff]
      %v246 = vld [vmem:[%s1 + $0xa8] sm:$0xff]
      %v247 = vld [vmem:[%s1 + $0xb0] sm:$0xff]
      %v248 = vld [vmem:[%s1 + $0xb8] sm:$0xff]
      %v249 = vld [vmem:[%s1 + $0xc0] sm:$0xff]
      %v250 = vld [vmem:[%s1 + $0xc8] sm:$0xff]
      %v251 = vld [vmem:[%s1 + $0xd0] sm:$0xff]
      %v252 = vld [vmem:[%s1 + $0xd8] sm:$0xff]
      %v253 = vld [vmem:[%s1 + $0xe0] sm:$0xff]
      %v254 = vld [vmem:[%s1 + $0xe8] sm:$0xff]
      %v255 = vld [vmem:[%s1 + $0xf0] sm:$0xff]
      %v256 = vld [vmem:[%s1 + $0xf8] sm:$0xff]
      %v257 = vld [vmem:[%s1 + $0x100] sm:$0xff]
      %v258 = vld [vmem:[%s1 + $0x108] sm:$0xff]
      %v259 = vld [vmem:[%s1 + $0x110] sm:$0xff]
      %v260 = vld [vmem:[%s1 + $0x118] sm:$0xff]
      %v261 = vld [vmem:[%s2] sm:$0x1]
      %v263 = vlaneseq
      %v264 = vshrl.u32 %v263, 7
      %v265 = vsub.s32 0, %v264
      %v266 = vrot.slane %v261, %v265
      %vm268 = vcmask 261120
      %v270 = vsel %vm268, %v203, 0
      %v273 = vsel %vm268, %v206, 0
      %v276 = vsel %vm268, %v209, 0
      %v279 = vsel %vm268, %v212, 0
      %v282 = vsel %vm268, %v215, 0
      %v285 = vsel %vm268, %v218, 0
      %v288 = vsel %vm268, %v221, 0
      %v291 = vsel %vm268, %v224, 0
      %293 = vmatprep.subr.mxu0 0.0
      %294 = vmatpush1.msra.mxu0 %v240
      %295 = vmatprep.subr.mxu0 0.0
      %296 = vmatpush1.msra.mxu0 %v239
      %297 = vmatprep.subr.mxu0 0.0
      %298 = vmatpush1.msra.mxu0 %v238
      %299 = vmatprep.subr.mxu0 0.0
      %300 = vmatpush1.msra.mxu0 %v237
      %301 = vmatprep.subr.mxu0 0.0
      %302 = vmatpush1.msra.mxu0 %v236
      %303 = vmatprep.subr.mxu0 0.0
      %304 = vmatpush1.msra.mxu0 %v235
      %305 = vmatprep.subr.mxu0 0.0
      %306 = vmatpush1.msra.mxu0 %v234
      %307 = vmatprep.subr.mxu0 0.0
      %308 = vmatpush1.msra.mxu0 %v233
      %309 = vmatprep.subr.mxu0 0.0
      %310 = vmatpush1.msra.mxu0 %v232
      %311 = vmatprep.subr.mxu0 0.0
      %312 = vmatpush1.msra.mxu0 %v231
      %313 = vmatprep.subr.mxu0 0.0
      %314 = vmatpush1.msra.mxu0 %v230
      %315 = vmatprep.subr.mxu0 0.0
      %316 = vmatpush1.msra.mxu0 %v229
      %317 = vmatprep.subr.mxu0 0.0
      %318 = vmatpush1.msra.mxu0 %v228
      %319 = vmatprep.subr.mxu0 0.0
      %320 = vmatpush1.msra.mxu0 %v227
      %321 = vmatprep.subr.mxu0 0.0
      %322 = vmatpush1.msra.mxu0 %v226
      %323 = vmatprep.subr.mxu0 0.0
      %324 = vmatpush1.msra.mxu0 %v225
      %325 = vmatprep.subr.mxu0 0.0
      %326 = vmatpush2.msra.mxu0 %v256
      %327 = vmatprep.subr.mxu0 0.0
      %328 = vmatpush2.msra.mxu0 %v255
      %329 = vmatprep.subr.mxu0 0.0
      %330 = vmatpush2.msra.mxu0 %v254
      %331 = vmatprep.subr.mxu0 0.0
      %332 = vmatpush2.msra.mxu0 %v253
      %333 = vmatprep.subr.mxu0 0.0
      %334 = vmatpush2.msra.mxu0 %v252
      %335 = vmatprep.subr.mxu0 0.0
      %336 = vmatpush2.msra.mxu0 %v251
      %337 = vmatprep.subr.mxu0 0.0
      %338 = vmatpush2.msra.mxu0 %v250
      %339 = vmatprep.subr.mxu0 0.0
      %340 = vmatpush2.msra.mxu0 %v249
      %341 = vmatprep.subr.mxu0 0.0
      %342 = vmatpush2.msra.mxu0 %v248
      %343 = vmatprep.subr.mxu0 0.0
      %344 = vmatpush2.msra.mxu0 %v247
      %345 = vmatprep.subr.mxu0 0.0
      %346 = vmatpush2.msra.mxu0 %v246
      %347 = vmatprep.subr.mxu0 0.0
      %348 = vmatpush2.msra.mxu0 %v245
      %349 = vmatprep.subr.mxu0 0.0
      %350 = vmatpush2.msra.mxu0 %v244
      %351 = vmatprep.subr.mxu0 0.0
      %352 = vmatpush2.msra.mxu0 %v243
      %353 = vmatprep.subr.mxu0 0.0
      %354 = vmatpush2.msra.mxu0 %v242
      %355 = vmatprep.subr.mxu0 0.0
      %356 = vmatpush2.msra.mxu0 %v241
      %357 = vmatprep.mubr.f32.mxu0 %v202
      %358 = vmatmul.mubr.f32.gmra.mxu0 %v201
      %v359 = vpop.f32.mrf.mxu0
      %v360 = vadd.f32 %v266, %v359
      %v361 = vpop.f32.mrf.mxu0
      %362 = vmatprep.mubr.f32.mxu0 %v205
      %363 = vmatmul.mubr.f32.gmra.mxu0 %v204
      %v364 = vpop.f32.mrf.mxu0
      %v365 = vadd.f32 %v266, %v364
      %v366 = vpop.f32.mrf.mxu0
      %367 = vmatprep.mubr.f32.mxu0 %v208
      %368 = vmatmul.mubr.f32.gmra.mxu0 %v207
      %v369 = vpop.f32.mrf.mxu0
      %v370 = vadd.f32 %v266, %v369
      %v371 = vpop.f32.mrf.mxu0
      %372 = vmatprep.mubr.f32.mxu0 %v211
      %373 = vmatmul.mubr.f32.gmra.mxu0 %v210
      %v374 = vpop.f32.mrf.mxu0
      %v375 = vadd.f32 %v266, %v374
      %v376 = vpop.f32.mrf.mxu0
      %377 = vmatprep.mubr.f32.mxu0 %v214
      %378 = vmatmul.mubr.f32.gmra.mxu0 %v213
      %v379 = vpop.f32.mrf.mxu0
      %v380 = vadd.f32 %v266, %v379
      %v381 = vpop.f32.mrf.mxu0
      %382 = vmatprep.mubr.f32.mxu0 %v217
      %383 = vmatmul.mubr.f32.gmra.mxu0 %v216
      %v384 = vpop.f32.mrf.mxu0
      %v385 = vadd.f32 %v266, %v384
      %v386 = vpop.f32.mrf.mxu0
      %387 = vmatprep.mubr.f32.mxu0 %v220
      %388 = vmatmul.mubr.f32.gmra.mxu0 %v219
      %v389 = vpop.f32.mrf.mxu0
      %v390 = vadd.f32 %v266, %v389
      %v391 = vpop.f32.mrf.mxu0
      %392 = vmatprep.mubr.f32.mxu0 %v223
      %393 = vmatmul.mubr.f32.gmra.mxu0 %v222
      %v394 = vpop.f32.mrf.mxu0
      %v395 = vadd.f32 %v266, %v394
      %v396 = vpop.f32.mrf.mxu0
      %397 = vdwg.mxu0
      %398 = vmatprep.subr.mxu0 0.0
      %399 = vmatpush1.msra.mxu0 0.0
      %400 = vmatprep.subr.mxu0 0.0
      %401 = vmatpush1.msra.mxu0 0.0
      %402 = vmatprep.subr.mxu0 0.0
      %403 = vmatpush1.msra.mxu0 0.0
      %404 = vmatprep.subr.mxu0 0.0
      %405 = vmatpush1.msra.mxu0 0.0
      %406 = vmatprep.subr.mxu0 0.0
      %407 = vmatpush1.msra.mxu0 0.0
      %408 = vmatprep.subr.mxu0 0.0
      %409 = vmatpush1.msra.mxu0 0.0
      %410 = vmatprep.subr.mxu0 0.0
      %411 = vmatpush1.msra.mxu0 0.0
      %412 = vmatprep.subr.mxu0 0.0
      %413 = vmatpush1.msra.mxu0 0.0
      %414 = vmatprep.subr.mxu0 0.0
      %415 = vmatpush1.msra.mxu0 0.0
      %416 = vmatprep.subr.mxu0 0.0
      %417 = vmatpush1.msra.mxu0 0.0
      %418 = vmatprep.subr.mxu0 0.0
      %419 = vmatpush1.msra.mxu0 0.0
      %420 = vmatprep.subr.mxu0 0.0
      %421 = vmatpush1.msra.mxu0 0.0
      %422 = vmatprep.subr.mxu0 0.0
      %423 = vmatpush1.msra.mxu0 %v260
      %424 = vmatprep.subr.mxu0 0.0
      %425 = vmatpush1.msra.mxu0 %v259
      %426 = vmatprep.subr.mxu0 0.0
      %427 = vmatpush1.msra.mxu0 %v258
      %428 = vmatprep.subr.mxu0 0.0
      %429 = vmatpush1.msra.mxu0 %v257
      %430 = vmatprep.subr.mxu0 0.0
      %431 = vmatpush2.msra.mxu0 0.0
      %432 = vmatprep.subr.mxu0 0.0
      %433 = vmatpush2.msra.mxu0 0.0
      %434 = vmatprep.subr.mxu0 0.0
      %435 = vmatpush2.msra.mxu0 0.0
      %436 = vmatprep.subr.mxu0 0.0
      %437 = vmatpush2.msra.mxu0 0.0
      %438 = vmatprep.subr.mxu0 0.0
      %439 = vmatpush2.msra.mxu0 0.0
      %440 = vmatprep.subr.mxu0 0.0
      %441 = vmatpush2.msra.mxu0 0.0
      %442 = vmatprep.subr.mxu0 0.0
      %443 = vmatpush2.msra.mxu0 0.0
      %444 = vmatprep.subr.mxu0 0.0
      %445 = vmatpush2.msra.mxu0 0.0
      %446 = vmatprep.subr.mxu0 0.0
      %447 = vmatpush2.msra.mxu0 0.0
      %448 = vmatprep.subr.mxu0 0.0
      %449 = vmatpush2.msra.mxu0 0.0
      %450 = vmatprep.subr.mxu0 0.0
      %451 = vmatpush2.msra.mxu0 0.0
      %452 = vmatprep.subr.mxu0 0.0
      %453 = vmatpush2.msra.mxu0 0.0
      %454 = vmatprep.subr.mxu0 0.0
      %455 = vmatpush2.msra.mxu0 0.0
      %456 = vmatprep.subr.mxu0 0.0
      %457 = vmatpush2.msra.mxu0 0.0
      %458 = vmatprep.subr.mxu0 0.0
      %459 = vmatpush2.msra.mxu0 0.0
      %460 = vmatprep.subr.mxu0 0.0
      %461 = vmatpush2.msra.mxu0 0.0
      %462 = vmatprep.mubr.f32.mxu0 0.0
      %463 = vmatmul.mubr.f32.gmra.mxu0 %v270
      %v464 = vpop.f32.mrf.mxu0
      %v465 = vadd.f32 %v360, %v464
      %v466 = vpop.f32.mrf.mxu0
      %467 = vmatprep.mubr.f32.mxu0 0.0
      %468 = vmatmul.mubr.f32.gmra.mxu0 %v273
      %v469 = vpop.f32.mrf.mxu0
      %v470 = vadd.f32 %v365, %v469
      %v471 = vpop.f32.mrf.mxu0
      %472 = vmatprep.mubr.f32.mxu0 0.0
      %473 = vmatmul.mubr.f32.gmra.mxu0 %v276
      %v474 = vpop.f32.mrf.mxu0
      %v475 = vadd.f32 %v370, %v474
      %v476 = vpop.f32.mrf.mxu0
      %477 = vmatprep.mubr.f32.mxu0 0.0
      %478 = vmatmul.mubr.f32.gmra.mxu0 %v279
      %v479 = vpop.f32.mrf.mxu0
      %v480 = vadd.f32 %v375, %v479
      %v481 = vpop.f32.mrf.mxu0
      %482 = vmatprep.mubr.f32.mxu0 0.0
      %483 = vmatmul.mubr.f32.gmra.mxu0 %v282
      %v484 = vpop.f32.mrf.mxu0
      %v485 = vadd.f32 %v380, %v484
      %v486 = vpop.f32.mrf.mxu0
      %487 = vmatprep.mubr.f32.mxu0 0.0
      %488 = vmatmul.mubr.f32.gmra.mxu0 %v285
      %v489 = vpop.f32.mrf.mxu0
      %v490 = vadd.f32 %v385, %v489
      %v491 = vpop.f32.mrf.mxu0
      %492 = vmatprep.mubr.f32.mxu0 0.0
      %493 = vmatmul.mubr.f32.gmra.mxu0 %v288
      %v494 = vpop.f32.mrf.mxu0
      %v495 = vadd.f32 %v390, %v494
      %v496 = vpop.f32.mrf.mxu0
      %497 = vmatprep.mubr.f32.mxu0 0.0
      %498 = vmatmul.mubr.f32.gmra.mxu0 %v291
      %v499 = vpop.f32.mrf.mxu0
      %v500 = vadd.f32 %v395, %v499
      %v501 = vpop.f32.mrf.mxu0
      %502 = vdwg.mxu0
      %503 = vst [vmem:[%s175] sm:$0xff] %v465
      %504 = vst [vmem:[%s175 + $0x8] sm:$0xff] %v470
      %505 = vst [vmem:[%s175 + $0x10] sm:$0xff] %v475
      %506 = vst [vmem:[%s175 + $0x18] sm:$0xff] %v480
      %507 = vst [vmem:[%s175 + $0x20] sm:$0xff] %v485
      %508 = vst [vmem:[%s175 + $0x28] sm:$0xff] %v490
      %509 = vst [vmem:[%s175 + $0x30] sm:$0xff] %v495
      %510 = vst [vmem:[%s175 + $0x38] sm:$0xff] %v500
      %s511 = smul.u32 8, %s14
      %p512 = scmp.lt.s32.totalorder %s511, 15
      %s513 = scalar_select %p512, %s511, 15
      %s514 = smul.addr %s513, 8
      %s515 = scalar_lea.vmem %s3, %s514
      // Predicated region
      $region33: #{decoder_forward_pallas.5} parent=31 // pred_check
        %p516 = pneg %p100
      $region34: #{decoder_forward_pallas.5} parent=31 // pred_check_branch
        %518 = sbr.rel (%p516) target = $region36
      $region35: #{decoder_forward_pallas.5} parent=31 // pred_region
        %s519 = smul.u32 8, %s14
      $region36: #{decoder_forward_pallas.5} parent=31 // pred_fallthru
        _
    $region32: #{decoder_forward_pallas.5} parent=5 // pred_fallthru
      _
    %p520 = scmp.le.s32.totalorder 2, %s9
    // Predicated region
    $region37: #{decoder_forward_pallas.5} parent=5 // pred_check
      %p521 = pneg %p520
    $region38: #{decoder_forward_pallas.5} parent=5 // pred_check_branch
      %523 = sbr.rel (%p521) target = $region40
    $region39: #{decoder_forward_pallas.5} parent=5 // pred_region
      %s524 = ssub.s32 %s9, 2
      // Predicated region
      $region41: #{decoder_forward_pallas.5} parent=39 // pred_check
        %p525 = pneg %p106
      $region42: #{decoder_forward_pallas.5} parent=39 // pred_check_branch
        %527 = sbr.rel (%p525) target = $region44
      $region43: #{decoder_forward_pallas.5} parent=39 // pred_region
        %s528 = smul.u32 8, %s15
        %p529 = scmp.lt.s32.totalorder %s528, 15
        %s530 = scalar_select %p529, %s528, 15
        %s531 = smul.addr %s530, 8
        %s532 = scalar_lea.vmem %s3, %s531
      $region44: #{decoder_forward_pallas.5} parent=39 // pred_fallthru
        _
    $region40: #{decoder_forward_pallas.5} parent=5 // pred_fallthru
      _
  $region6: #{decoder_forward_pallas.5} parent=0 // loop_footer
    %s13 = sadd.s32 1, %s9
  $region7: #{decoder_forward_pallas.5} parent=0 // loop_footer_branch
    %8 = sbr.rel target = $region3
  $region8: #{decoder_forward_pallas.5} parent=0 // loop_exit
    _

</llo_original>
